<compile_context>
chip_gen: v7x
topology: tpu7x:2x2x1
jax: 0.10.0
libtpu: 0.0.40
codegen_flags: <defaults>
</compile_context>

<pallas_src>
import functools

import jax
import jax.numpy as jnp
from jax.experimental import pallas as pl
from jax.experimental.pallas import tpu as pltpu


# ----------------------------- Pallas kernel ------------------------------- #

def _gat_decoder_kernel(x_ref, adjt_ref, *refs, layer_cfgs, negative_slope):
    """Fused GAT decoder: all GATConv layers + nan->-100 + final Linear.

    refs layout: for each layer (w_all, att_src, att_dst, bias), then
                 head_w_t, head_b, then the output ref (appended by Pallas).
    """
    out_ref = refs[-1]
    head_b = refs[-2][...]          # [1, out_dim]
    head_w = refs[-3][...]          # [out_dim_in, out_dim]
    lrefs = refs[:-3]

    x = x_ref[...]                  # [N, Fin]
    adj_t = adjt_ref[...]           # [N_dst, N_src], 1.0 iff edge src -> dst
    edge_mask = adj_t > 0.0
    # targets with no incoming edges -> output 0 (softmax over an empty set)
    has_in_edge = jnp.sum(adj_t, axis=-1, keepdims=True) > 0.0     # [N_dst, 1]
    neg_big = jnp.float32(-1e30)

    for li, (H, C, concat) in enumerate(layer_cfgs):
        w_all = lrefs[4 * li][...]          # [Fin, H*C]
        a_src_all = lrefs[4 * li + 1][...]  # [1, H*C]
        a_dst_all = lrefs[4 * li + 2][...]  # [1, H*C]
        bias = lrefs[4 * li + 3][...]       # [1, H*C] (concat) or [1, C] (mean)

        # One wide MXU pass for all heads of this layer.
        h_all = jnp.dot(x, w_all, preferred_element_type=jnp.float32)  # [N, H*C]

        head_outs = []
        for hi in range(H):
            lo, hi_ = hi * C, (hi + 1) * C
            h = h_all[:, lo:hi_]                                        # [N, C]
            a_src = jnp.sum(h * a_src_all[:, lo:hi_], axis=-1,
                            keepdims=True)                              # [N, 1]
            a_dst = jnp.sum(h * a_dst_all[:, lo:hi_], axis=-1,
                            keepdims=True)                              # [N, 1]

            # logits[j, i] = leaky_relu(a_src[i] + a_dst[j]); dst on sublanes,
            # src on lanes -> softmax over lanes, aggregation without attn.T.
            logits = a_dst + a_src.T                                    # [Nd, Ns]
            logits = jnp.where(logits >= 0, logits, negative_slope * logits)

            masked = jnp.where(edge_mask, logits, neg_big)
            m = jnp.max(masked, axis=-1, keepdims=True)                 # [Nd, 1]
            e = jnp.exp(masked - m)          # non-edges underflow to 0 (m finite)
            denom = jnp.sum(e, axis=-1, keepdims=True)                  # >= 1
            attn = e * pl.reciprocal(denom, approx=True)                # EUP slot

            # out[j] = sum_i attn[j, i] * h[i]  — no transpose needed.
            head_outs.append(
                jnp.dot(attn, h, preferred_element_type=jnp.float32))   # [Nd, C]

        if concat:
            y = head_outs[0] if H == 1 else jnp.concatenate(head_outs, axis=-1)
        else:
            y = head_outs[0]
            for o in head_outs[1:]:
                y = y + o
            y = y * jnp.float32(1.0 / H)

        y = jnp.where(has_in_edge, y, 0.0)   # isolated targets -> 0 (+ bias below)
        x = y + bias

    # nan -> -100, then the head Linear.
    x = jnp.where(jnp.isnan(x), jnp.float32(-100.0), x)
    out_ref[...] = (jnp.dot(x, head_w, preferred_element_type=jnp.float32)
                    + head_b)


# ----------------------------- host-side wrapper ---------------------------- #

def gat_decoder_forward(x, adj_t, params, *, negative_slope):
    """Reproduces GATDecoder.forward(x, edge_index, edge_attr) in one call.

    adj_t[j, i] = 1.0 iff there is an edge i -> j (dst-major adjacency).
    """
    N = x.shape[0]
    layer_cfgs = []
    flat_args = []
    for layer in params["layers"]:
        H, fin, C = layer["w"].shape
        concat = bool(layer["concat"])
        # Pack per-head weights into a single wide matmul operand.
        w_all = jnp.transpose(layer["w"], (1, 0, 2)).reshape(fin, H * C)
        a_src = layer["att_src"].reshape(1, H * C)
        a_dst = layer["att_dst"].reshape(1, H * C)
        bias = layer["bias"].reshape(1, -1)
        layer_cfgs.append((H, C, concat))
        flat_args += [w_all, a_src, a_dst, bias]

    out_dim = params["head_w_t"].shape[1]
    flat_args += [params["head_w_t"], params["head_b"].reshape(1, out_dim)]

    kernel = functools.partial(_gat_decoder_kernel,
                               layer_cfgs=tuple(layer_cfgs),
                               negative_slope=negative_slope)
    # Everything (weights + intermediates) is tiny -> whole-array VMEM blocks,
    # no grid, single launch. TODO(synk): if N grows large, tile adj_t over dst
    # rows with a grid axis + online softmax (dense adj is O(N^2)).
    return pl.pallas_call(
        kernel,
        out_shape=jax.ShapeDtypeStruct((N, out_dim), jnp.float32),
    )(x, adj_t, *flat_args)


# --------------------------------- setup ------------------------------------ #

def make_params(key, in_dim, num_hidden, out_dim, num_layers, nhead, nhead_out):
    """Deterministic synthetic parameters matching GATDecoder.__init__ shapes."""
    def nrm(k, shape, scale=0.1):
        return scale * jax.random.normal(k, shape, dtype=jnp.float32)

    layers = []
    if num_layers == 1:
        dims = [(in_dim, out_dim, nhead_out, False)]
    else:
        dims = [(in_dim, num_hidden, nhead, True)]
        for _ in range(1, num_layers - 1):
            dims.append((num_hidden * nhead, num_hidden, nhead, True))
        dims.append((num_hidden * nhead, out_dim, nhead_out, True))

    for fin, c, h, concat in dims:
        key, k1, k2, k3, k4 = jax.random.split(key, 5)
        bdim = h * c if concat else c
        layers.append(dict(
            w=nrm(k1, (h, fin, c)),            # PyG lin weight, per head
            att_src=nrm(k2, (h, 1, c)),
            att_dst=nrm(k3, (h, 1, c)),
            bias=nrm(k4, (bdim,)),
            concat=concat,
        ))

    key, k1, k2 = jax.random.split(key, 3)
    head_w = nrm(k1, (out_dim, out_dim))       # nn.Linear weight [out, in]
    head_b = nrm(k2, (out_dim,))
    return dict(layers=layers, head_w_t=head_w.T, head_b=head_b)


if __name__ == "__main__":
    # Small configuration consistent with the module (nhead_out=1 so the head
    # Linear(out_dim, out_dim) is shape-consistent, as in the reference usage).
    N = 16
    in_dim, num_hidden, out_dim = 16, 32, 32
    num_layers, nhead, nhead_out = 2, 2, 1
    negative_slope = 0.2

    key = jax.random.PRNGKey(0)
    key, kx, ke = jax.random.split(key, 3)

    x = jax.random.normal(kx, (N, in_dim), dtype=jnp.float32)

    # Synthetic graph: ring + skip edges  ->  edge_index [2, E]
    src = jnp.concatenate([jnp.arange(N), jnp.arange(N)])
    dst = jnp.concatenate([(jnp.arange(N) + 1) % N, (jnp.arange(N) + 2) % N])
    edge_index = jnp.stack([src, dst])                  # [2, 32]
    edge_attr = jax.random.normal(ke, (edge_index.shape[1], 3), dtype=jnp.float32)
    del edge_attr  # TODO(synk): unused — GATConv was constructed without edge_dim.

    # Dense dst-major adjacency for the kernel: adj_t[j, i] = 1 iff edge i -> j.
    adj_t = jnp.zeros((N, N), dtype=jnp.float32).at[
        edge_index[1], edge_index[0]].set(1.0)

    params = make_params(key, in_dim, num_hidden, out_dim,
                         num_layers, nhead, nhead_out)

    out = gat_decoder_forward(x, adj_t, params, negative_slope=negative_slope)
    out = jax.block_until_ready(out)
    assert out.shape == (N, out_dim) and bool(jnp.all(jnp.isfinite(out)))
    print("KERNEL_OK")
</pallas_src>

<mosaic_0001>
module attributes {stable_mosaic.version = 11 : i64} {
  func.func @_gat_decoder_kernel(%arg0: memref<16x16xf32, #tpu.memory_space<vmem>>, %arg1: memref<16x16xf32, #tpu.memory_space<vmem>>, %arg2: memref<16x64xf32, #tpu.memory_space<vmem>>, %arg3: memref<1x64xf32, #tpu.memory_space<vmem>>, %arg4: memref<1x64xf32, #tpu.memory_space<vmem>>, %arg5: memref<1x64xf32, #tpu.memory_space<vmem>>, %arg6: memref<64x32xf32, #tpu.memory_space<vmem>>, %arg7: memref<1x32xf32, #tpu.memory_space<vmem>>, %arg8: memref<1x32xf32, #tpu.memory_space<vmem>>, %arg9: memref<1x32xf32, #tpu.memory_space<vmem>>, %arg10: memref<32x32xf32, #tpu.memory_space<vmem>>, %arg11: memref<1x32xf32, #tpu.memory_space<vmem>>, %arg12: memref<16x32xf32, #tpu.memory_space<vmem>>) attributes {dimension_semantics = [], scalar_prefetch = 0 : i64, scratch_operands = 0 : i64, tpu.core_type = #tpu.core_type<tc>} {
    %c0 = arith.constant 0 : index
    %c0_0 = arith.constant 0 : index
    %0 = vector.load %arg11[%c0, %c0_0] : memref<1x32xf32, #tpu.memory_space<vmem>>, vector<1x32xf32>
    %c0_1 = arith.constant 0 : index
    %c0_2 = arith.constant 0 : index
    %1 = vector.load %arg10[%c0_1, %c0_2] : memref<32x32xf32, #tpu.memory_space<vmem>>, vector<32x32xf32>
    %c0_3 = arith.constant 0 : index
    %c0_4 = arith.constant 0 : index
    %2 = vector.load %arg0[%c0_3, %c0_4] : memref<16x16xf32, #tpu.memory_space<vmem>>, vector<16x16xf32>
    %c0_5 = arith.constant 0 : index
    %c0_6 = arith.constant 0 : index
    %3 = vector.load %arg1[%c0_5, %c0_6] : memref<16x16xf32, #tpu.memory_space<vmem>>, vector<16x16xf32>
    %cst = arith.constant 0.000000e+00 : f32
    %4 = vector.broadcast %cst : f32 to vector<16x16xf32>
    %5 = arith.cmpf ogt, %3, %4 : vector<16x16xf32>
    %cst_7 = arith.constant dense<0.000000e+00> : vector<16xf32>
    %6 = vector.multi_reduction <add>, %3, %cst_7 [1] : vector<16x16xf32> to vector<16xf32>
    %7 = vector.shape_cast %6 : vector<16xf32> to vector<16x1xf32>
    %cst_8 = arith.constant 0.000000e+00 : f32
    %8 = vector.broadcast %cst_8 : f32 to vector<16x1xf32>
    %9 = arith.cmpf ogt, %7, %8 : vector<16x1xf32>
    %c0_9 = arith.constant 0 : index
    %c0_10 = arith.constant 0 : index
    %10 = vector.load %arg2[%c0_9, %c0_10] : memref<16x64xf32, #tpu.memory_space<vmem>>, vector<16x64xf32>
    %c0_11 = arith.constant 0 : index
    %c0_12 = arith.constant 0 : index
    %11 = vector.load %arg3[%c0_11, %c0_12] : memref<1x64xf32, #tpu.memory_space<vmem>>, vector<1x64xf32>
    %c0_13 = arith.constant 0 : index
    %c0_14 = arith.constant 0 : index
    %12 = vector.load %arg4[%c0_13, %c0_14] : memref<1x64xf32, #tpu.memory_space<vmem>>, vector<1x64xf32>
    %c0_15 = arith.constant 0 : index
    %c0_16 = arith.constant 0 : index
    %13 = vector.load %arg5[%c0_15, %c0_16] : memref<1x64xf32, #tpu.memory_space<vmem>>, vector<1x64xf32>
    %cst_17 = arith.constant dense<0.000000e+00> : vector<16x64xf32>
    %14 = tpu.matmul %2, %10, %cst_17 {dimension_numbers = #tpu.dot_dimension_numbers<[1], [0], [0], [1], [0, 0, 1, 1], [], []>} : vector<16x16xf32>, vector<16x64xf32>, vector<16x64xf32> -> vector<16x64xf32>
    %15 = vector.extract_strided_slice %14 {offsets = [0, 0], sizes = [16, 32], strides = [1, 1]} : vector<16x64xf32> to vector<16x32xf32>
    %16 = vector.extract_strided_slice %11 {offsets = [0, 0], sizes = [1, 32], strides = [1, 1]} : vector<1x64xf32> to vector<1x32xf32>
    %17 = vector.broadcast %16 : vector<1x32xf32> to vector<16x32xf32>
    %18 = arith.mulf %15, %17 : vector<16x32xf32>
    %cst_18 = arith.constant dense<0.000000e+00> : vector<16xf32>
    %19 = vector.multi_reduction <add>, %18, %cst_18 [1] : vector<16x32xf32> to vector<16xf32>
    %20 = vector.shape_cast %19 : vector<16xf32> to vector<16x1xf32>
    %21 = vector.extract_strided_slice %12 {offsets = [0, 0], sizes = [1, 32], strides = [1, 1]} : vector<1x64xf32> to vector<1x32xf32>
    %22 = vector.broadcast %21 : vector<1x32xf32> to vector<16x32xf32>
    %23 = arith.mulf %15, %22 : vector<16x32xf32>
    %cst_19 = arith.constant dense<0.000000e+00> : vector<16xf32>
    %24 = vector.multi_reduction <add>, %23, %cst_19 [1] : vector<16x32xf32> to vector<16xf32>
    %25 = vector.shape_cast %24 : vector<16xf32> to vector<16x1xf32>
    %26 = tpu.transpose %20, [1, 0] : vector<16x1xf32> -> vector<1x16xf32>
    %27 = vector.broadcast %25 : vector<16x1xf32> to vector<16x16xf32>
    %28 = vector.broadcast %26 : vector<1x16xf32> to vector<16x16xf32>
    %29 = arith.addf %27, %28 : vector<16x16xf32>
    %cst_20 = arith.constant 0.000000e+00 : f32
    %30 = vector.broadcast %cst_20 : f32 to vector<16x16xf32>
    %31 = arith.cmpf oge, %29, %30 : vector<16x16xf32>
    %cst_21 = arith.constant 2.000000e-01 : f32
    %32 = vector.broadcast %cst_21 : f32 to vector<16x16xf32>
    %33 = arith.mulf %32, %29 : vector<16x16xf32>
    %34 = arith.select %31, %29, %33 : vector<16x16xi1>, vector<16x16xf32>
    %cst_22 = arith.constant -1.000000e+30 : f32
    %35 = vector.broadcast %cst_22 : f32 to vector<16x16xf32>
    %36 = arith.select %5, %34, %35 : vector<16x16xi1>, vector<16x16xf32>
    %cst_23 = arith.constant dense<0xFF800000> : vector<16xf32>
    %37 = vector.multi_reduction <maximumf>, %36, %cst_23 [1] : vector<16x16xf32> to vector<16xf32>
    %38 = vector.shape_cast %37 : vector<16xf32> to vector<16x1xf32>
    %39 = vector.broadcast %38 : vector<16x1xf32> to vector<16x16xf32>
    %40 = arith.subf %36, %39 : vector<16x16xf32>
    %41 = math.exp %40 : vector<16x16xf32>
    %cst_24 = arith.constant dense<0.000000e+00> : vector<16xf32>
    %42 = vector.multi_reduction <add>, %41, %cst_24 [1] : vector<16x16xf32> to vector<16xf32>
    %43 = vector.shape_cast %42 : vector<16xf32> to vector<16x1xf32>
    %44 = tpu.reciprocal %43 {approx = true} : vector<16x1xf32> -> vector<16x1xf32>
    %45 = vector.broadcast %44 : vector<16x1xf32> to vector<16x16xf32>
    %46 = arith.mulf %41, %45 : vector<16x16xf32>
    %cst_25 = arith.constant dense<0.000000e+00> : vector<16x32xf32>
    %47 = tpu.matmul %46, %15, %cst_25 {dimension_numbers = #tpu.dot_dimension_numbers<[1], [0], [0], [1], [0, 0, 1, 1], [], []>} : vector<16x16xf32>, vector<16x32xf32>, vector<16x32xf32> -> vector<16x32xf32>
    %48 = vector.extract_strided_slice %14 {offsets = [0, 32], sizes = [16, 32], strides = [1, 1]} : vector<16x64xf32> to vector<16x32xf32>
    %49 = vector.extract_strided_slice %11 {offsets = [0, 32], sizes = [1, 32], strides = [1, 1]} : vector<1x64xf32> to vector<1x32xf32>
    %50 = vector.broadcast %49 : vector<1x32xf32> to vector<16x32xf32>
    %51 = arith.mulf %48, %50 : vector<16x32xf32>
    %cst_26 = arith.constant dense<0.000000e+00> : vector<16xf32>
    %52 = vector.multi_reduction <add>, %51, %cst_26 [1] : vector<16x32xf32> to vector<16xf32>
    %53 = vector.shape_cast %52 : vector<16xf32> to vector<16x1xf32>
    %54 = vector.extract_strided_slice %12 {offsets = [0, 32], sizes = [1, 32], strides = [1, 1]} : vector<1x64xf32> to vector<1x32xf32>
    %55 = vector.broadcast %54 : vector<1x32xf32> to vector<16x32xf32>
    %56 = arith.mulf %48, %55 : vector<16x32xf32>
    %cst_27 = arith.constant dense<0.000000e+00> : vector<16xf32>
    %57 = vector.multi_reduction <add>, %56, %cst_27 [1] : vector<16x32xf32> to vector<16xf32>
    %58 = vector.shape_cast %57 : vector<16xf32> to vector<16x1xf32>
    %59 = tpu.transpose %53, [1, 0] : vector<16x1xf32> -> vector<1x16xf32>
    %60 = vector.broadcast %58 : vector<16x1xf32> to vector<16x16xf32>
    %61 = vector.broadcast %59 : vector<1x16xf32> to vector<16x16xf32>
    %62 = arith.addf %60, %61 : vector<16x16xf32>
    %cst_28 = arith.constant 0.000000e+00 : f32
    %63 = vector.broadcast %cst_28 : f32 to vector<16x16xf32>
    %64 = arith.cmpf oge, %62, %63 : vector<16x16xf32>
    %cst_29 = arith.constant 2.000000e-01 : f32
    %65 = vector.broadcast %cst_29 : f32 to vector<16x16xf32>
    %66 = arith.mulf %65, %62 : vector<16x16xf32>
    %67 = arith.select %64, %62, %66 : vector<16x16xi1>, vector<16x16xf32>
    %cst_30 = arith.constant -1.000000e+30 : f32
    %68 = vector.broadcast %cst_30 : f32 to vector<16x16xf32>
    %69 = arith.select %5, %67, %68 : vector<16x16xi1>, vector<16x16xf32>
    %cst_31 = arith.constant dense<0xFF800000> : vector<16xf32>
    %70 = vector.multi_reduction <maximumf>, %69, %cst_31 [1] : vector<16x16xf32> to vector<16xf32>
    %71 = vector.shape_cast %70 : vector<16xf32> to vector<16x1xf32>
    %72 = vector.broadcast %71 : vector<16x1xf32> to vector<16x16xf32>
    %73 = arith.subf %69, %72 : vector<16x16xf32>
    %74 = math.exp %73 : vector<16x16xf32>
    %cst_32 = arith.constant dense<0.000000e+00> : vector<16xf32>
    %75 = vector.multi_reduction <add>, %74, %cst_32 [1] : vector<16x16xf32> to vector<16xf32>
    %76 = vector.shape_cast %75 : vector<16xf32> to vector<16x1xf32>
    %77 = tpu.reciprocal %76 {approx = true} : vector<16x1xf32> -> vector<16x1xf32>
    %78 = vector.broadcast %77 : vector<16x1xf32> to vector<16x16xf32>
    %79 = arith.mulf %74, %78 : vector<16x16xf32>
    %cst_33 = arith.constant dense<0.000000e+00> : vector<16x32xf32>
    %80 = tpu.matmul %79, %48, %cst_33 {dimension_numbers = #tpu.dot_dimension_numbers<[1], [0], [0], [1], [0, 0, 1, 1], [], []>} : vector<16x16xf32>, vector<16x32xf32>, vector<16x32xf32> -> vector<16x32xf32>
    %81 = tpu.concatenate %47, %80 in 1 : vector<16x32xf32>, vector<16x32xf32> -> vector<16x64xf32>
    %cst_34 = arith.constant 0.000000e+00 : f32
    %82 = vector.shape_cast %9 : vector<16x1xi1> to vector<16x1xi1>
    %83 = vector.broadcast %82 : vector<16x1xi1> to vector<16x64xi1>
    %84 = vector.broadcast %cst_34 : f32 to vector<16x64xf32>
    %85 = arith.select %83, %81, %84 : vector<16x64xi1>, vector<16x64xf32>
    %86 = vector.broadcast %13 : vector<1x64xf32> to vector<16x64xf32>
    %87 = arith.addf %85, %86 : vector<16x64xf32>
    %c0_35 = arith.constant 0 : index
    %c0_36 = arith.constant 0 : index
    %88 = vector.load %arg6[%c0_35, %c0_36] : memref<64x32xf32, #tpu.memory_space<vmem>>, vector<64x32xf32>
    %c0_37 = arith.constant 0 : index
    %c0_38 = arith.constant 0 : index
    %89 = vector.load %arg7[%c0_37, %c0_38] : memref<1x32xf32, #tpu.memory_space<vmem>>, vector<1x32xf32>
    %c0_39 = arith.constant 0 : index
    %c0_40 = arith.constant 0 : index
    %90 = vector.load %arg8[%c0_39, %c0_40] : memref<1x32xf32, #tpu.memory_space<vmem>>, vector<1x32xf32>
    %c0_41 = arith.constant 0 : index
    %c0_42 = arith.constant 0 : index
    %91 = vector.load %arg9[%c0_41, %c0_42] : memref<1x32xf32, #tpu.memory_space<vmem>>, vector<1x32xf32>
    %cst_43 = arith.constant dense<0.000000e+00> : vector<16x32xf32>
    %92 = tpu.matmul %87, %88, %cst_43 {dimension_numbers = #tpu.dot_dimension_numbers<[1], [0], [0], [1], [0, 0, 1, 1], [], []>} : vector<16x64xf32>, vector<64x32xf32>, vector<16x32xf32> -> vector<16x32xf32>
    %93 = vector.broadcast %89 : vector<1x32xf32> to vector<16x32xf32>
    %94 = arith.mulf %92, %93 : vector<16x32xf32>
    %cst_44 = arith.constant dense<0.000000e+00> : vector<16xf32>
    %95 = vector.multi_reduction <add>, %94, %cst_44 [1] : vector<16x32xf32> to vector<16xf32>
    %96 = vector.shape_cast %95 : vector<16xf32> to vector<16x1xf32>
    %97 = vector.broadcast %90 : vector<1x32xf32> to vector<16x32xf32>
    %98 = arith.mulf %92, %97 : vector<16x32xf32>
    %cst_45 = arith.constant dense<0.000000e+00> : vector<16xf32>
    %99 = vector.multi_reduction <add>, %98, %cst_45 [1] : vector<16x32xf32> to vector<16xf32>
    %100 = vector.shape_cast %99 : vector<16xf32> to vector<16x1xf32>
    %101 = tpu.transpose %96, [1, 0] : vector<16x1xf32> -> vector<1x16xf32>
    %102 = vector.broadcast %100 : vector<16x1xf32> to vector<16x16xf32>
    %103 = vector.broadcast %101 : vector<1x16xf32> to vector<16x16xf32>
    %104 = arith.addf %102, %103 : vector<16x16xf32>
    %cst_46 = arith.constant 0.000000e+00 : f32
    %105 = vector.broadcast %cst_46 : f32 to vector<16x16xf32>
    %106 = arith.cmpf oge, %104, %105 : vector<16x16xf32>
    %cst_47 = arith.constant 2.000000e-01 : f32
    %107 = vector.broadcast %cst_47 : f32 to vector<16x16xf32>
    %108 = arith.mulf %107, %104 : vector<16x16xf32>
    %109 = arith.select %106, %104, %108 : vector<16x16xi1>, vector<16x16xf32>
    %cst_48 = arith.constant -1.000000e+30 : f32
    %110 = vector.broadcast %cst_48 : f32 to vector<16x16xf32>
    %111 = arith.select %5, %109, %110 : vector<16x16xi1>, vector<16x16xf32>
    %cst_49 = arith.constant dense<0xFF800000> : vector<16xf32>
    %112 = vector.multi_reduction <maximumf>, %111, %cst_49 [1] : vector<16x16xf32> to vector<16xf32>
    %113 = vector.shape_cast %112 : vector<16xf32> to vector<16x1xf32>
    %114 = vector.broadcast %113 : vector<16x1xf32> to vector<16x16xf32>
    %115 = arith.subf %111, %114 : vector<16x16xf32>
    %116 = math.exp %115 : vector<16x16xf32>
    %cst_50 = arith.constant dense<0.000000e+00> : vector<16xf32>
    %117 = vector.multi_reduction <add>, %116, %cst_50 [1] : vector<16x16xf32> to vector<16xf32>
    %118 = vector.shape_cast %117 : vector<16xf32> to vector<16x1xf32>
    %119 = tpu.reciprocal %118 {approx = true} : vector<16x1xf32> -> vector<16x1xf32>
    %120 = vector.broadcast %119 : vector<16x1xf32> to vector<16x16xf32>
    %121 = arith.mulf %116, %120 : vector<16x16xf32>
    %cst_51 = arith.constant dense<0.000000e+00> : vector<16x32xf32>
    %122 = tpu.matmul %121, %92, %cst_51 {dimension_numbers = #tpu.dot_dimension_numbers<[1], [0], [0], [1], [0, 0, 1, 1], [], []>} : vector<16x16xf32>, vector<16x32xf32>, vector<16x32xf32> -> vector<16x32xf32>
    %cst_52 = arith.constant 0.000000e+00 : f32
    %123 = vector.shape_cast %9 : vector<16x1xi1> to vector<16x1xi1>
    %124 = vector.broadcast %123 : vector<16x1xi1> to vector<16x32xi1>
    %125 = vector.broadcast %cst_52 : f32 to vector<16x32xf32>
    %126 = arith.select %124, %122, %125 : vector<16x32xi1>, vector<16x32xf32>
    %127 = vector.broadcast %91 : vector<1x32xf32> to vector<16x32xf32>
    %128 = arith.addf %126, %127 : vector<16x32xf32>
    %129 = arith.cmpf one, %128, %128 : vector<16x32xf32>
    %cst_53 = arith.constant -1.000000e+02 : f32
    %130 = vector.broadcast %cst_53 : f32 to vector<16x32xf32>
    %131 = arith.select %129, %130, %128 : vector<16x32xi1>, vector<16x32xf32>
    %cst_54 = arith.constant dense<0.000000e+00> : vector<16x32xf32>
    %132 = tpu.matmul %131, %1, %cst_54 {dimension_numbers = #tpu.dot_dimension_numbers<[1], [0], [0], [1], [0, 0, 1, 1], [], []>} : vector<16x32xf32>, vector<32x32xf32>, vector<16x32xf32> -> vector<16x32xf32>
    %133 = vector.broadcast %0 : vector<1x32xf32> to vector<16x32xf32>
    %134 = arith.addf %132, %133 : vector<16x32xf32>
    %c0_55 = arith.constant 0 : index
    %c0_56 = arith.constant 0 : index
    %135 = vector.load %arg12[%c0_55, %c0_56] : memref<16x32xf32, #tpu.memory_space<vmem>>, vector<16x32xf32>
    tpu.vector_store %arg12[%c0_55, %c0_56], %134 {strides = array<i32>} : memref<16x32xf32, #tpu.memory_space<vmem>>, vector<16x32xf32>,
    return
  }
}

</mosaic_0001>

<llo_original>
// kernel: tpu_custom_call.1
$region0: #{tpu_custom_call.1}
  #allocation0 [shape = 'u32[]', space=smem, size = 0x4, offset = 0x4, fixed_abs, tag = 'smem constant byte address 0x4 - core index']
  #allocation1 [shape = 'u32[144,128]{1,0:T(1,128)}', space=vmem, size = 0x12000, scoped, tag = 'internal scratch']
  %s0 = inlined_call_operand.vmem [shape: f32[16,16], index: 0, kind: input, shape index: {}]
  %s1 = inlined_call_operand.vmem [shape: f32[16,16], index: 1, kind: input, shape index: {}]
  %s2 = inlined_call_operand.vmem [shape: f32[16,64], index: 2, kind: input, shape index: {}]
  %s3 = inlined_call_operand.vmem [shape: f32[1,64], index: 3, kind: input, shape index: {}]
  %s4 = inlined_call_operand.vmem [shape: f32[1,64], index: 4, kind: input, shape index: {}]
  %s5 = inlined_call_operand.vmem [shape: f32[1,64], index: 5, kind: input, shape index: {}]
  %s6 = inlined_call_operand.vmem [shape: f32[64,32], index: 6, kind: input, shape index: {}]
  %s7 = inlined_call_operand.vmem [shape: f32[1,32], index: 7, kind: input, shape index: {}]
  %s8 = inlined_call_operand.vmem [shape: f32[1,32], index: 8, kind: input, shape index: {}]
  %s9 = inlined_call_operand.vmem [shape: f32[1,32], index: 9, kind: input, shape index: {}]
  %s10 = inlined_call_operand.vmem [shape: f32[32,32], index: 10, kind: input, shape index: {}]
  %s11 = inlined_call_operand.vmem [shape: f32[1,32], index: 11, kind: input, shape index: {}]
  %s12 = inlined_call_operand.hbm [shape: f32[16,32], index: 12, kind: output, shape index: {}]
  %s13 = sld [smem:[#allocation0]]
  $region58: #{tpu_custom_call.1} parent=0
    _
  %s15 = ssub.s32 1, %s13
  %s16 = scalar_select 0, %s15, %s13
  $region1: #{tpu_custom_call.1} parent=0
    #allocation2 [shape = 'u8[8192]{0}', space=vmem, size = 0x2000, scoped, tag = 'output window, operand 0, single buffered']
    #allocation3 [shape = 's32[1]{0}', space=sflag, size = 0x4, scoped, tag = 'scoped memory for tpu_custom_call.1']
    %17 = vsyncpa [#allocation3], 0
    // Predicated region
    $region2: #{tpu_custom_call.1} parent=1 // pred_check
      _
    $region3: #{tpu_custom_call.1} parent=1 // pred_check_branch
      %19 = sbr.rel (0) target = $region5
    $region4: #{tpu_custom_call.1} parent=1 // pred_region
      _
    $region5: #{tpu_custom_call.1} parent=1 // pred_fallthru
      _
    // Predicated region
    $region6: #{tpu_custom_call.1} parent=1 // pred_check
      _
    $region7: #{tpu_custom_call.1} parent=1 // pred_check_branch
      %21 = sbr.rel (0) target = $region9
    $region8: #{tpu_custom_call.1} parent=1 // pred_region
      _
    $region9: #{tpu_custom_call.1} parent=1 // pred_fallthru
      _
    // Predicated region
    $region10: #{tpu_custom_call.1} parent=1 // pred_check
      _
    $region11: #{tpu_custom_call.1} parent=1 // pred_check_branch
      %23 = sbr.rel (0) target = $region13
    $region12: #{tpu_custom_call.1} parent=1 // pred_region
      _
    $region13: #{tpu_custom_call.1} parent=1 // pred_fallthru
      _
    // Predicated region
    $region14: #{tpu_custom_call.1} parent=1 // pred_check
      _
    $region15: #{tpu_custom_call.1} parent=1 // pred_check_branch
      %25 = sbr.rel (0) target = $region17
    $region16: #{tpu_custom_call.1} parent=1 // pred_region
      _
    $region17: #{tpu_custom_call.1} parent=1 // pred_fallthru
      _
    // Predicated region
    $region18: #{tpu_custom_call.1} parent=1 // pred_check
      _
    $region19: #{tpu_custom_call.1} parent=1 // pred_check_branch
      %27 = sbr.rel (0) target = $region21
    $region20: #{tpu_custom_call.1} parent=1 // pred_region
      _
    $region21: #{tpu_custom_call.1} parent=1 // pred_fallthru
      _
    // Predicated region
    $region22: #{tpu_custom_call.1} parent=1 // pred_check
      _
    $region23: #{tpu_custom_call.1} parent=1 // pred_check_branch
      %29 = sbr.rel (0) target = $region25
    $region24: #{tpu_custom_call.1} parent=1 // pred_region
      _
    $region25: #{tpu_custom_call.1} parent=1 // pred_fallthru
      _
    // Predicated region
    $region26: #{tpu_custom_call.1} parent=1 // pred_check
      _
    $region27: #{tpu_custom_call.1} parent=1 // pred_check_branch
      %31 = sbr.rel (0) target = $region29
    $region28: #{tpu_custom_call.1} parent=1 // pred_region
      _
    $region29: #{tpu_custom_call.1} parent=1 // pred_fallthru
      _
    // Predicated region
    $region30: #{tpu_custom_call.1} parent=1 // pred_check
      _
    $region31: #{tpu_custom_call.1} parent=1 // pred_check_branch
      %33 = sbr.rel (0) target = $region33
    $region32: #{tpu_custom_call.1} parent=1 // pred_region
      _
    $region33: #{tpu_custom_call.1} parent=1 // pred_fallthru
      _
    // Predicated region
    $region34: #{tpu_custom_call.1} parent=1 // pred_check
      _
    $region35: #{tpu_custom_call.1} parent=1 // pred_check_branch
      %35 = sbr.rel (0) target = $region37
    $region36: #{tpu_custom_call.1} parent=1 // pred_region
      _
    $region37: #{tpu_custom_call.1} parent=1 // pred_fallthru
      _
    // Predicated region
    $region38: #{tpu_custom_call.1} parent=1 // pred_check
      _
    $region39: #{tpu_custom_call.1} parent=1 // pred_check_branch
      %37 = sbr.rel (0) target = $region41
    $region40: #{tpu_custom_call.1} parent=1 // pred_region
      _
    $region41: #{tpu_custom_call.1} parent=1 // pred_fallthru
      _
    // Predicated region
    $region42: #{tpu_custom_call.1} parent=1 // pred_check
      _
    $region43: #{tpu_custom_call.1} parent=1 // pred_check_branch
      %39 = sbr.rel (0) target = $region45
    $region44: #{tpu_custom_call.1} parent=1 // pred_region
      _
    $region45: #{tpu_custom_call.1} parent=1 // pred_fallthru
      _
    // Predicated region
    $region46: #{tpu_custom_call.1} parent=1 // pred_check
      _
    $region47: #{tpu_custom_call.1} parent=1 // pred_check_branch
      %41 = sbr.rel (0) target = $region49
    $region48: #{tpu_custom_call.1} parent=1 // pred_region
      _
    $region49: #{tpu_custom_call.1} parent=1 // pred_fallthru
      _
    %v42 = vld [vmem:[%s11] sm:$0x1]
    %v43 = vld [vmem:[%s10] sm:$0xff]
    %v44 = vld [vmem:[%s10 + $0x8] sm:$0xff]
    %v45 = vld [vmem:[%s10 + $0x10] sm:$0xff]
    %v46 = vld [vmem:[%s10 + $0x18] sm:$0xff]
    %v47 = vld [vmem:[%s0] sm:$0xff]
    %v48 = vld [vmem:[%s0 + $0x8] sm:$0xff]
    %v49 = vld [vmem:[%s1] sm:$0xff]
    %v50 = vld [vmem:[%s1 + $0x8] sm:$0xff]
    %vm51 = vcmp.gt.f32.partialorder %v49, 0.0
    %vm52 = vcmp.gt.f32.partialorder %v50, 0.0
    %vm53 = vcmask 130048
    %v54 = vsel %vm53, %v49, 0.0
    %55 = vadd.xlane.f32.xlu0 %v54
    %v56 = vpop.xlane.xlu0 %55
    %v57 = vsel %vm53, %v50, 0.0
    %58 = vadd.xlane.f32.xlu0 %v57
    %v59 = vpop.xlane.xlu0 %58
    %vm60 = vcmp.gt.f32.partialorder %v56, 0.0
    %vm61 = vcmp.gt.f32.partialorder %v59, 0.0
    %v62 = vld [vmem:[%s2] sm:$0xff]
    %v63 = vld [vmem:[%s2 + $0x8] sm:$0xff]
    %v64 = vld [vmem:[%s3] sm:$0x1]
    %v65 = vld [vmem:[%s4] sm:$0x1]
    %v66 = vld [vmem:[%s5] sm:$0x1]
    %v68 = vsel %vm53, %v47, 0
    %v71 = vsel %vm53, %v48, 0
    %73 = vmatprep.subr.mxu0 0.0
    %74 = vmatpush1.msra.mxu0 %v62
    %75 = vmatprep.subr.mxu0 0.0
    %76 = vmatpush1.msra.mxu0 %v63
    %77 = vmatprep.subr.mxu0 0.0
    %78 = vmatpush1.msra.mxu0 0.0
    %79 = vmatprep.subr.mxu0 0.0
    %80 = vmatpush1.msra.mxu0 0.0
    %81 = vmatprep.subr.mxu0 0.0
    %82 = vmatpush1.msra.mxu0 0.0
    %83 = vmatprep.subr.mxu0 0.0
    %84 = vmatpush1.msra.mxu0 0.0
    %85 = vmatprep.subr.mxu0 0.0
    %86 = vmatpush1.msra.mxu0 0.0
    %87 = vmatprep.subr.mxu0 0.0
    %88 = vmatpush1.msra.mxu0 0.0
    %89 = vmatprep.subr.mxu0 0.0
    %90 = vmatpush1.msra.mxu0 0.0
    %91 = vmatprep.subr.mxu0 0.0
    %92 = vmatpush1.msra.mxu0 0.0
    %93 = vmatprep.subr.mxu0 0.0
    %94 = vmatpush1.msra.mxu0 0.0
    %95 = vmatprep.subr.mxu0 0.0
    %96 = vmatpush1.msra.mxu0 0.0
    %97 = vmatprep.subr.mxu0 0.0
    %98 = vmatpush1.msra.mxu0 0.0
    %99 = vmatprep.subr.mxu0 0.0
    %100 = vmatpush1.msra.mxu0 0.0
    %101 = vmatprep.subr.mxu0 0.0
    %102 = vmatpush1.msra.mxu0 0.0
    %103 = vmatprep.subr.mxu0 0.0
    %104 = vmatpush1.msra.mxu0 0.0
    %105 = vmatprep.subr.mxu0 0.0
    %106 = vmatpush1.msra.mxu0 0.0
    %107 = vmatprep.subr.mxu0 0.0
    %108 = vmatpush1.msra.mxu0 0.0
    %109 = vmatprep.subr.mxu0 0.0
    %110 = vmatpush1.msra.mxu0 0.0
    %111 = vmatprep.subr.mxu0 0.0
    %112 = vmatpush1.msra.mxu0 0.0
    %113 = vmatprep.subr.mxu0 0.0
    %114 = vmatpush1.msra.mxu0 0.0
    %115 = vmatprep.subr.mxu0 0.0
    %116 = vmatpush1.msra.mxu0 0.0
    %117 = vmatprep.subr.mxu0 0.0
    %118 = vmatpush1.msra.mxu0 0.0
    %119 = vmatprep.subr.mxu0 0.0
    %120 = vmatpush1.msra.mxu0 0.0
    %121 = vmatprep.subr.mxu0 0.0
    %122 = vmatpush1.msra.mxu0 0.0
    %123 = vmatprep.subr.mxu0 0.0
    %124 = vmatpush1.msra.mxu0 0.0
    %125 = vmatprep.subr.mxu0 0.0
    %126 = vmatpush1.msra.mxu0 0.0
    %127 = vmatprep.subr.mxu0 0.0
    %128 = vmatpush1.msra.mxu0 0.0
    %129 = vmatprep.subr.mxu0 0.0
    %130 = vmatpush1.msra.mxu0 0.0
    %131 = vmatprep.subr.mxu0 0.0
    %132 = vmatpush1.msra.mxu0 0.0
    %133 = vmatprep.subr.mxu0 0.0
    %134 = vmatpush1.msra.mxu0 0.0
    %135 = vmatprep.subr.mxu0 0.0
    %136 = vmatpush1.msra.mxu0 0.0
    %137 = vmatprep.mubr.f32.mxu0 0.0
    %138 = vmatmul.mubr.f32.gmra.mrb[0].mxu0 %v68
    %v139 = vpop.f32.mrb[0].mxu0
    %v140 = vadd.f32 0.0, %v139
    %v141 = vpop.f32.mrb[0].mxu0
    %142 = vmatprep.mubr.f32.mxu0 0.0
    %143 = vmatmul.mubr.f32.gmra.mrb[0].mxu0 %v71
    %v144 = vpop.f32.mrb[0].mxu0
    %v145 = vadd.f32 0.0, %v144
    %v146 = vpop.f32.mrb[0].mxu0
    %147 = vdwg.mxu0
    %v149 = vlaneseq
    %v150 = vshrl.u32 %v149, 7
    %v151 = vsub.s32 0, %v150
    %v152 = vrot.slane %v64, %v151
    %v154 = vmul.f32 %v140, %v152
    %v155 = vmul.f32 %v145, %v152
    %vm156 = vcmask 261120
    %v157 = vsel %vm156, %v154, 0.0
    %158 = vadd.xlane.f32.xlu0 %v157
    %v159 = vpop.xlane.xlu0 %158
    %v160 = vsel %vm156, %v155, 0.0
    %161 = vadd.xlane.f32.xlu0 %v160
    %v162 = vpop.xlane.xlu0 %161
    %v164 = vlaneseq
    %v165 = vshrl.u32 %v164, 7
    %v166 = vsub.s32 0, %v165
    %v167 = vrot.slane %v65, %v166
    %v169 = vmul.f32 %v140, %v167
    %v170 = vmul.f32 %v145, %v167
    %v171 = vsel %vm156, %v169, 0.0
    %172 = vadd.xlane.f32.xlu0 %v171
    %v173 = vpop.xlane.xlu0 %172
    %v174 = vsel %vm156, %v170, 0.0
    %175 = vadd.xlane.f32.xlu0 %v174
    %v176 = vpop.xlane.xlu0 %175
    %177 = vxpose.xlu0.b32.start [1/16] %v159, 128
    %178 = vxpose.xlu0.b32.cont [2/16] %v162, 128
    %179 = vxpose.xlu0.b32.cont [3/16] 0.0, 128
    %180 = vxpose.xlu0.b32.cont [4/16] 0.0, 128
    %181 = vxpose.xlu0.b32.cont [5/16] 0.0, 128
    %182 = vxpose.xlu0.b32.cont [6/16] 0.0, 128
    %183 = vxpose.xlu0.b32.cont [7/16] 0.0, 128
    %184 = vxpose.xlu0.b32.cont [8/16] 0.0, 128
    %185 = vxpose.xlu0.b32.cont [9/16] 0.0, 128
    %186 = vxpose.xlu0.b32.cont [10/16] 0.0, 128
    %187 = vxpose.xlu0.b32.cont [11/16] 0.0, 128
    %188 = vxpose.xlu0.b32.cont [12/16] 0.0, 128
    %189 = vxpose.xlu0.b32.cont [13/16] 0.0, 128
    %190 = vxpose.xlu0.b32.cont [14/16] 0.0, 128
    %191 = vxpose.xlu0.b32.cont [15/16] 0.0, 128
    %192 = vxpose.xlu0.b32.end [16/16] 0.0, 128
    %v193 = vpop.trf.xlu0
    %v194 = vpop.trf.xlu0
    %v195 = vpop.trf.xlu0
    %v196 = vpop.trf.xlu0
    %v197 = vpop.trf.xlu0
    %v198 = vpop.trf.xlu0
    %v199 = vpop.trf.xlu0
    %v200 = vpop.trf.xlu0
    %v201 = vpop.trf.xlu0
    %v202 = vpop.trf.xlu0
    %v203 = vpop.trf.xlu0
    %v204 = vpop.trf.xlu0
    %v205 = vpop.trf.xlu0
    %v206 = vpop.trf.xlu0
    %v207 = vpop.trf.xlu0
    %v208 = vpop.trf.xlu0
    %v209 = vlaneseq
    %v210 = vshrl.u32 %v209, 7
    %v211 = vsub.s32 0, %v210
    %v212 = vrot.slane %v193, %v211
    %v213 = vadd.f32 %v173, %v212
    %v214 = vadd.f32 %v176, %v212
    %vm215 = vcmp.ge.f32.partialorder %v213, 0.0
    %vm216 = vcmp.ge.f32.partialorder %v214, 0.0
    %v217 = vmul.f32 %v213, 0.2
    %v218 = vmul.f32 %v214, 0.2
    %v219 = vsel %vm215, %v213, %v217
    %v220 = vsel %vm216, %v214, %v218
    %v221 = vsel %vm51, %v219, -1e+30
    %v222 = vsel %vm52, %v220, -1e+30
    %v223 = vsel %vm53, %v221, -inf
    %224 = vmax.xlane.f32.xlu0 %v223
    %v225 = vpop.xlane.xlu0 %224
    %v226 = vsel %vm53, %v222, -inf
    %227 = vmax.xlane.f32.xlu0 %v226
    %v228 = vpop.xlane.xlu0 %227
    %v229 = vsub.f32 %v221, %v225
    %v230 = vsub.f32 %v222, %v228
    %v231 = vmul.f32 %v229, 1.442695
    %v232 = vpow.pop %v231
    %v233 = vmul.f32 %v230, 1.442695
    %v234 = vpow.pop %v233
    %v235 = vsel %vm53, %v232, 0.0
    %236 = vadd.xlane.f32.xlu0 %v235
    %v237 = vpop.xlane.xlu0 %236
    %v238 = vsel %vm53, %v234, 0.0
    %239 = vadd.xlane.f32.xlu0 %v238
    %v240 = vpop.xlane.xlu0 %239
    %v241 = vrcp.pop %v237
    %v242 = vrcp.pop %v240
    %v243 = vmul.f32 %v232, %v241
    %v244 = vmul.f32 %v234, %v242
    %v246 = vsel %vm53, %v243, 0
    %v249 = vsel %vm53, %v244, 0
    %251 = vmatprep.subr.mxu0 0.0
    %252 = vmatpush1.msra.mxu0 %v140
    %253 = vmatprep.subr.mxu0 0.0
    %254 = vmatpush1.msra.mxu0 %v145
    %255 = vmatprep.subr.mxu0 0.0
    %256 = vmatpush1.msra.mxu0 0.0
    %257 = vmatprep.subr.mxu0 0.0
    %258 = vmatpush1.msra.mxu0 0.0
    %259 = vmatprep.subr.mxu0 0.0
    %260 = vmatpush1.msra.mxu0 0.0
    %261 = vmatprep.subr.mxu0 0.0
    %262 = vmatpush1.msra.mxu0 0.0
    %263 = vmatprep.subr.mxu0 0.0
    %264 = vmatpush1.msra.mxu0 0.0
    %265 = vmatprep.subr.mxu0 0.0
    %266 = vmatpush1.msra.mxu0 0.0
    %267 = vmatprep.subr.mxu0 0.0
    %268 = vmatpush1.msra.mxu0 0.0
    %269 = vmatprep.subr.mxu0 0.0
    %270 = vmatpush1.msra.mxu0 0.0
    %271 = vmatprep.subr.mxu0 0.0
    %272 = vmatpush1.msra.mxu0 0.0
    %273 = vmatprep.subr.mxu0 0.0
    %274 = vmatpush1.msra.mxu0 0.0
    %275 = vmatprep.subr.mxu0 0.0
    %276 = vmatpush1.msra.mxu0 0.0
    %277 = vmatprep.subr.mxu0 0.0
    %278 = vmatpush1.msra.mxu0 0.0
    %279 = vmatprep.subr.mxu0 0.0
    %280 = vmatpush1.msra.mxu0 0.0
    %281 = vmatprep.subr.mxu0 0.0
    %282 = vmatpush1.msra.mxu0 0.0
    %283 = vmatprep.subr.mxu0 0.0
    %284 = vmatpush1.msra.mxu0 0.0
    %285 = vmatprep.subr.mxu0 0.0
    %286 = vmatpush1.msra.mxu0 0.0
    %287 = vmatprep.subr.mxu0 0.0
    %288 = vmatpush1.msra.mxu0 0.0
    %289 = vmatprep.subr.mxu0 0.0
    %290 = vmatpush1.msra.mxu0 0.0
    %291 = vmatprep.subr.mxu0 0.0
    %292 = vmatpush1.msra.mxu0 0.0
    %293 = vmatprep.subr.mxu0 0.0
    %294 = vmatpush1.msra.mxu0 0.0
    %295 = vmatprep.subr.mxu0 0.0
    %296 = vmatpush1.msra.mxu0 0.0
    %297 = vmatprep.subr.mxu0 0.0
    %298 = vmatpush1.msra.mxu0 0.0
    %299 = vmatprep.subr.mxu0 0.0
    %300 = vmatpush1.msra.mxu0 0.0
    %301 = vmatprep.subr.mxu0 0.0
    %302 = vmatpush1.msra.mxu0 0.0
    %303 = vmatprep.subr.mxu0 0.0
    %304 = vmatpush1.msra.mxu0 0.0
    %305 = vmatprep.subr.mxu0 0.0
    %306 = vmatpush1.msra.mxu0 0.0
    %307 = vmatprep.subr.mxu0 0.0
    %308 = vmatpush1.msra.mxu0 0.0
    %309 = vmatprep.subr.mxu0 0.0
    %310 = vmatpush1.msra.mxu0 0.0
    %311 = vmatprep.subr.mxu0 0.0
    %312 = vmatpush1.msra.mxu0 0.0
    %313 = vmatprep.subr.mxu0 0.0
    %314 = vmatpush1.msra.mxu0 0.0
    %315 = vmatprep.mubr.f32.mxu0 0.0
    %316 = vmatmul.mubr.f32.gmra.mrb[0].mxu0 %v246
    %v317 = vpop.f32.mrb[0].mxu0
    %v318 = vadd.f32 0.0, %v317
    %v319 = vpop.f32.mrb[0].mxu0
    %320 = vmatprep.mubr.f32.mxu0 0.0
    %321 = vmatmul.mubr.f32.gmra.mrb[0].mxu0 %v249
    %v322 = vpop.f32.mrb[0].mxu0
    %v323 = vadd.f32 0.0, %v322
    %v324 = vpop.f32.mrb[0].mxu0
    %325 = vdwg.mxu0
    %328 = vrot.lane.b32.xlu0 %v154, 96
    %v329 = vpop.permute.xlu0 %328
    %330 = vrot.lane.b32.xlu0 %v155, 96
    %v331 = vpop.permute.xlu0 %330
    %v334 = vsel %vm156, %v329, 0.0
    %335 = vadd.xlane.f32.xlu0 %v334
    %v336 = vpop.xlane.xlu0 %335
    %v337 = vsel %vm156, %v331, 0.0
    %338 = vadd.xlane.f32.xlu0 %v337
    %v339 = vpop.xlane.xlu0 %338
    %342 = vrot.lane.b32.xlu0 %v169, 96
    %v343 = vpop.permute.xlu0 %342
    %344 = vrot.lane.b32.xlu0 %v170, 96
    %v345 = vpop.permute.xlu0 %344
    %v348 = vsel %vm156, %v343, 0.0
    %349 = vadd.xlane.f32.xlu0 %v348
    %v350 = vpop.xlane.xlu0 %349
    %v351 = vsel %vm156, %v345, 0.0
    %352 = vadd.xlane.f32.xlu0 %v351
    %v353 = vpop.xlane.xlu0 %352
    %354 = vxpose.xlu0.b32.start [1/16] %v336, 128
    %355 = vxpose.xlu0.b32.cont [2/16] %v339, 128
    %356 = vxpose.xlu0.b32.cont [3/16] 0.0, 128
    %357 = vxpose.xlu0.b32.cont [4/16] 0.0, 128
    %358 = vxpose.xlu0.b32.cont [5/16] 0.0, 128
    %359 = vxpose.xlu0.b32.cont [6/16] 0.0, 128
    %360 = vxpose.xlu0.b32.cont [7/16] 0.0, 128
    %361 = vxpose.xlu0.b32.cont [8/16] 0.0, 128
    %362 = vxpose.xlu0.b32.cont [9/16] 0.0, 128
    %363 = vxpose.xlu0.b32.cont [10/16] 0.0, 128
    %364 = vxpose.xlu0.b32.cont [11/16] 0.0, 128
    %365 = vxpose.xlu0.b32.cont [12/16] 0.0, 128
    %366 = vxpose.xlu0.b32.cont [13/16] 0.0, 128
    %367 = vxpose.xlu0.b32.cont [14/16] 0.0, 128
    %368 = vxpose.xlu0.b32.cont [15/16] 0.0, 128
    %369 = vxpose.xlu0.b32.end [16/16] 0.0, 128
    %v370 = vpop.trf.xlu0
    %v371 = vpop.trf.xlu0
    %v372 = vpop.trf.xlu0
    %v373 = vpop.trf.xlu0
    %v374 = vpop.trf.xlu0
    %v375 = vpop.trf.xlu0
    %v376 = vpop.trf.xlu0
    %v377 = vpop.trf.xlu0
    %v378 = vpop.trf.xlu0
    %v379 = vpop.trf.xlu0
    %v380 = vpop.trf.xlu0
    %v381 = vpop.trf.xlu0
    %v382 = vpop.trf.xlu0
    %v383 = vpop.trf.xlu0
    %v384 = vpop.trf.xlu0
    %v385 = vpop.trf.xlu0
    %v386 = vlaneseq
    %v387 = vshrl.u32 %v386, 7
    %v388 = vsub.s32 0, %v387
    %v389 = vrot.slane %v370, %v388
    %v390 = vadd.f32 %v350, %v389
    %v391 = vadd.f32 %v353, %v389
    %vm392 = vcmp.ge.f32.partialorder %v390, 0.0
    %vm393 = vcmp.ge.f32.partialorder %v391, 0.0
    %v394 = vmul.f32 %v390, 0.2
    %v395 = vmul.f32 %v391, 0.2
    %v396 = vsel %vm392, %v390, %v394
    %v397 = vsel %vm393, %v391, %v395
    %v398 = vsel %vm51, %v396, -1e+30
    %v399 = vsel %vm52, %v397, -1e+30
    %v400 = vsel %vm53, %v398, -inf
    %401 = vmax.xlane.f32.xlu0 %v400
    %v402 = vpop.xlane.xlu0 %401
    %v403 = vsel %vm53, %v399, -inf
    %404 = vmax.xlane.f32.xlu0 %v403
    %v405 = vpop.xlane.xlu0 %404
    %v406 = vsub.f32 %v398, %v402
    %v407 = vsub.f32 %v399, %v405
    %v408 = vmul.f32 %v406, 1.442695
    %v409 = vpow.pop %v408
    %v410 = vmul.f32 %v407, 1.442695
    %v411 = vpow.pop %v410
    %v412 = vsel %vm53, %v409, 0.0
    %413 = vadd.xlane.f32.xlu0 %v412
    %v414 = vpop.xlane.xlu0 %413
    %v415 = vsel %vm53, %v411, 0.0
    %416 = vadd.xlane.f32.xlu0 %v415
    %v417 = vpop.xlane.xlu0 %416
    %v418 = vrcp.pop %v414
    %v419 = vrcp.pop %v417
    %v420 = vmul.f32 %v409, %v418
    %v421 = vmul.f32 %v411, %v419
    %424 = vrot.lane.b32.xlu0 %v140, 96
    %v425 = vpop.permute.xlu0 %424
    %426 = vrot.lane.b32.xlu0 %v145, 96
    %v427 = vpop.permute.xlu0 %426
    %v431 = vsel %vm53, %v420, 0
    %v434 = vsel %vm53, %v421, 0
    %436 = vmatprep.subr.mxu0 0.0
    %437 = vmatpush1.msra.mxu0 %v425
    %438 = vmatprep.subr.mxu0 0.0
    %439 = vmatpush1.msra.mxu0 %v427
    %440 = vmatprep.subr.mxu0 0.0
    %441 = vmatpush1.msra.mxu0 0.0
    %442 = vmatprep.subr.mxu0 0.0
    %443 = vmatpush1.msra.mxu0 0.0
    %444 = vmatprep.subr.mxu0 0.0
    %445 = vmatpush1.msra.mxu0 0.0
    %446 = vmatprep.subr.mxu0 0.0
    %447 = vmatpush1.msra.mxu0 0.0
    %448 = vmatprep.subr.mxu0 0.0
    %449 = vmatpush1.msra.mxu0 0.0
    %450 = vmatprep.subr.mxu0 0.0
    %451 = vmatpush1.msra.mxu0 0.0
    %452 = vmatprep.subr.mxu0 0.0
    %453 = vmatpush1.msra.mxu0 0.0
    %454 = vmatprep.subr.mxu0 0.0
    %455 = vmatpush1.msra.mxu0 0.0
    %456 = vmatprep.subr.mxu0 0.0
    %457 = vmatpush1.msra.mxu0 0.0
    %458 = vmatprep.subr.mxu0 0.0
    %459 = vmatpush1.msra.mxu0 0.0
    %460 = vmatprep.subr.mxu0 0.0
    %461 = vmatpush1.msra.mxu0 0.0
    %462 = vmatprep.subr.mxu0 0.0
    %463 = vmatpush1.msra.mxu0 0.0
    %464 = vmatprep.subr.mxu0 0.0
    %465 = vmatpush1.msra.mxu0 0.0
    %466 = vmatprep.subr.mxu0 0.0
    %467 = vmatpush1.msra.mxu0 0.0
    %468 = vmatprep.subr.mxu0 0.0
    %469 = vmatpush1.msra.mxu0 0.0
    %470 = vmatprep.subr.mxu0 0.0
    %471 = vmatpush1.msra.mxu0 0.0
    %472 = vmatprep.subr.mxu0 0.0
    %473 = vmatpush1.msra.mxu0 0.0
    %474 = vmatprep.subr.mxu0 0.0
    %475 = vmatpush1.msra.mxu0 0.0
    %476 = vmatprep.subr.mxu0 0.0
    %477 = vmatpush1.msra.mxu0 0.0
    %478 = vmatprep.subr.mxu0 0.0
    %479 = vmatpush1.msra.mxu0 0.0
    %480 = vmatprep.subr.mxu0 0.0
    %481 = vmatpush1.msra.mxu0 0.0
    %482 = vmatprep.subr.mxu0 0.0
    %483 = vmatpush1.msra.mxu0 0.0
    %484 = vmatprep.subr.mxu0 0.0
    %485 = vmatpush1.msra.mxu0 0.0
    %486 = vmatprep.subr.mxu0 0.0
    %487 = vmatpush1.msra.mxu0 0.0
    %488 = vmatprep.subr.mxu0 0.0
    %489 = vmatpush1.msra.mxu0 0.0
    %490 = vmatprep.subr.mxu0 0.0
    %491 = vmatpush1.msra.mxu0 0.0
    %492 = vmatprep.subr.mxu0 0.0
    %493 = vmatpush1.msra.mxu0 0.0
    %494 = vmatprep.subr.mxu0 0.0
    %495 = vmatpush1.msra.mxu0 0.0
    %496 = vmatprep.subr.mxu0 0.0
    %497 = vmatpush1.msra.mxu0 0.0
    %498 = vmatprep.subr.mxu0 0.0
    %499 = vmatpush1.msra.mxu0 0.0
    %500 = vmatprep.mubr.f32.mxu0 0.0
    %501 = vmatmul.mubr.f32.gmra.mrb[0].mxu0 %v431
    %v502 = vpop.f32.mrb[0].mxu0
    %v503 = vadd.f32 0.0, %v502
    %v504 = vpop.f32.mrb[0].mxu0
    %505 = vmatprep.mubr.f32.mxu0 0.0
    %506 = vmatmul.mubr.f32.gmra.mrb[0].mxu0 %v434
    %v507 = vpop.f32.mrb[0].mxu0
    %v508 = vadd.f32 0.0, %v507
    %v509 = vpop.f32.mrb[0].mxu0
    %510 = vdwg.mxu0
    %513 = vrot.lane.b32.xlu0 %v503, 32
    %v514 = vpop.permute.xlu0 %513
    %515 = vrot.lane.b32.xlu0 %v508, 32
    %v516 = vpop.permute.xlu0 %515
    %v519 = vsel %vm156, %v318, %v514
    %v520 = vsel %vm156, %v323, %v516
    %v521 = vsel %vm60, 1, 0
    %v522 = vsel %vm61, 1, 0
    %vm523 = vcmp.eq.s32.totalorder %v521, 1
    %vm524 = vcmp.eq.s32.totalorder %v522, 1
    %v525 = vsel %vm523, %v519, 0.0
    %v526 = vsel %vm524, %v520, 0.0
    %v528 = vlaneseq
    %v529 = vshrl.u32 %v528, 7
    %v530 = vsub.s32 0, %v529
    %v531 = vrot.slane %v66, %v530
    %v533 = vadd.f32 %v525, %v531
    %v534 = vadd.f32 %v526, %v531
    %v535 = vld [vmem:[%s6] sm:$0xff]
    %v536 = vld [vmem:[%s6 + $0x8] sm:$0xff]
    %v537 = vld [vmem:[%s6 + $0x10] sm:$0xff]
    %v538 = vld [vmem:[%s6 + $0x18] sm:$0xff]
    %v539 = vld [vmem:[%s6 + $0x20] sm:$0xff]
    %v540 = vld [vmem:[%s6 + $0x28] sm:$0xff]
    %v541 = vld [vmem:[%s6 + $0x30] sm:$0xff]
    %v542 = vld [vmem:[%s6 + $0x38] sm:$0xff]
    %v543 = vld [vmem:[%s7] sm:$0x1]
    %v544 = vld [vmem:[%s8] sm:$0x1]
    %v545 = vld [vmem:[%s9] sm:$0x1]
    %vm546 = vcmask 523264
    %v548 = vsel %vm546, %v533, 0
    %v551 = vsel %vm546, %v534, 0
    %553 = vmatprep.subr.mxu0 0.0
    %554 = vmatpush1.msra.mxu0 %v535
    %555 = vmatprep.subr.mxu0 0.0
    %556 = vmatpush1.msra.mxu0 %v536
    %557 = vmatprep.subr.mxu0 0.0
    %558 = vmatpush1.msra.mxu0 %v537
    %559 = vmatprep.subr.mxu0 0.0
    %560 = vmatpush1.msra.mxu0 %v538
    %561 = vmatprep.subr.mxu0 0.0
    %562 = vmatpush1.msra.mxu0 %v539
    %563 = vmatprep.subr.mxu0 0.0
    %564 = vmatpush1.msra.mxu0 %v540
    %565 = vmatprep.subr.mxu0 0.0
    %566 = vmatpush1.msra.mxu0 %v541
    %567 = vmatprep.subr.mxu0 0.0
    %568 = vmatpush1.msra.mxu0 %v542
    %569 = vmatprep.subr.mxu0 0.0
    %570 = vmatpush1.msra.mxu0 0.0
    %571 = vmatprep.subr.mxu0 0.0
    %572 = vmatpush1.msra.mxu0 0.0
    %573 = vmatprep.subr.mxu0 0.0
    %574 = vmatpush1.msra.mxu0 0.0
    %575 = vmatprep.subr.mxu0 0.0
    %576 = vmatpush1.msra.mxu0 0.0
    %577 = vmatprep.subr.mxu0 0.0
    %578 = vmatpush1.msra.mxu0 0.0
    %579 = vmatprep.subr.mxu0 0.0
    %580 = vmatpush1.msra.mxu0 0.0
    %581 = vmatprep.subr.mxu0 0.0
    %582 = vmatpush1.msra.mxu0 0.0
    %583 = vmatprep.subr.mxu0 0.0
    %584 = vmatpush1.msra.mxu0 0.0
    %585 = vmatprep.subr.mxu0 0.0
    %586 = vmatpush1.msra.mxu0 0.0
    %587 = vmatprep.subr.mxu0 0.0
    %588 = vmatpush1.msra.mxu0 0.0
    %589 = vmatprep.subr.mxu0 0.0
    %590 = vmatpush1.msra.mxu0 0.0
    %591 = vmatprep.subr.mxu0 0.0
    %592 = vmatpush1.msra.mxu0 0.0
    %593 = vmatprep.subr.mxu0 0.0
    %594 = vmatpush1.msra.mxu0 0.0
    %595 = vmatprep.subr.mxu0 0.0
    %596 = vmatpush1.msra.mxu0 0.0
    %597 = vmatprep.subr.mxu0 0.0
    %598 = vmatpush1.msra.mxu0 0.0
    %599 = vmatprep.subr.mxu0 0.0
    %600 = vmatpush1.msra.mxu0 0.0
    %601 = vmatprep.subr.mxu0 0.0
    %602 = vmatpush1.msra.mxu0 0.0
    %603 = vmatprep.subr.mxu0 0.0
    %604 = vmatpush1.msra.mxu0 0.0
    %605 = vmatprep.subr.mxu0 0.0
    %606 = vmatpush1.msra.mxu0 0.0
    %607 = vmatprep.subr.mxu0 0.0
    %608 = vmatpush1.msra.mxu0 0.0
    %609 = vmatprep.subr.mxu0 0.0
    %610 = vmatpush1.msra.mxu0 0.0
    %611 = vmatprep.subr.mxu0 0.0
    %612 = vmatpush1.msra.mxu0 0.0
    %613 = vmatprep.subr.mxu0 0.0
    %614 = vmatpush1.msra.mxu0 0.0
    %615 = vmatprep.subr.mxu0 0.0
    %616 = vmatpush1.msra.mxu0 0.0
    %617 = vmatprep.mubr.f32.mxu0 0.0
    %618 = vmatmul.mubr.f32.gmra.mrb[0].mxu0 %v548
    %v619 = vpop.f32.mrb[0].mxu0
    %v620 = vadd.f32 0.0, %v619
    %v621 = vpop.f32.mrb[0].mxu0
    %622 = vmatprep.mubr.f32.mxu0 0.0
    %623 = vmatmul.mubr.f32.gmra.mrb[0].mxu0 %v551
    %v624 = vpop.f32.mrb[0].mxu0
    %v625 = vadd.f32 0.0, %v624
    %v626 = vpop.f32.mrb[0].mxu0
    %627 = vdwg.mxu0
    %v629 = vlaneseq
    %v630 = vshrl.u32 %v629, 7
    %v631 = vsub.s32 0, %v630
    %v632 = vrot.slane %v543, %v631
    %v634 = vmul.f32 %v620, %v632
    %v635 = vmul.f32 %v625, %v632
    %v636 = vsel %vm156, %v634, 0.0
    %637 = vadd.xlane.f32.xlu0 %v636
    %v638 = vpop.xlane.xlu0 %637
    %v639 = vsel %vm156, %v635, 0.0
    %640 = vadd.xlane.f32.xlu0 %v639
    %v641 = vpop.xlane.xlu0 %640
    %v643 = vlaneseq
    %v644 = vshrl.u32 %v643, 7
    %v645 = vsub.s32 0, %v644
    %v646 = vrot.slane %v544, %v645
    %v648 = vmul.f32 %v620, %v646
    %v649 = vmul.f32 %v625, %v646
    %v650 = vsel %vm156, %v648, 0.0
    %651 = vadd.xlane.f32.xlu0 %v650
    %v652 = vpop.xlane.xlu0 %651
    %v653 = vsel %vm156, %v649, 0.0
    %654 = vadd.xlane.f32.xlu0 %v653
    %v655 = vpop.xlane.xlu0 %654
    %656 = vxpose.xlu0.b32.start [1/16] %v638, 128
    %657 = vxpose.xlu0.b32.cont [2/16] %v641, 128
    %658 = vxpose.xlu0.b32.cont [3/16] 0.0, 128
    %659 = vxpose.xlu0.b32.cont [4/16] 0.0, 128
    %660 = vxpose.xlu0.b32.cont [5/16] 0.0, 128
    %661 = vxpose.xlu0.b32.cont [6/16] 0.0, 128
    %662 = vxpose.xlu0.b32.cont [7/16] 0.0, 128
    %663 = vxpose.xlu0.b32.cont [8/16] 0.0, 128
    %664 = vxpose.xlu0.b32.cont [9/16] 0.0, 128
    %665 = vxpose.xlu0.b32.cont [10/16] 0.0, 128
    %666 = vxpose.xlu0.b32.cont [11/16] 0.0, 128
    %667 = vxpose.xlu0.b32.cont [12/16] 0.0, 128
    %668 = vxpose.xlu0.b32.cont [13/16] 0.0, 128
    %669 = vxpose.xlu0.b32.cont [14/16] 0.0, 128
    %670 = vxpose.xlu0.b32.cont [15/16] 0.0, 128
    %671 = vxpose.xlu0.b32.end [16/16] 0.0, 128
    %v672 = vpop.trf.xlu0
    %v673 = vpop.trf.xlu0
    %v674 = vpop.trf.xlu0
    %v675 = vpop.trf.xlu0
    %v676 = vpop.trf.xlu0
    %v677 = vpop.trf.xlu0
    %v678 = vpop.trf.xlu0
    %v679 = vpop.trf.xlu0
    %v680 = vpop.trf.xlu0
    %v681 = vpop.trf.xlu0
    %v682 = vpop.trf.xlu0
    %v683 = vpop.trf.xlu0
    %v684 = vpop.trf.xlu0
    %v685 = vpop.trf.xlu0
    %v686 = vpop.trf.xlu0
    %v687 = vpop.trf.xlu0
    %v688 = vlaneseq
    %v689 = vshrl.u32 %v688, 7
    %v690 = vsub.s32 0, %v689
    %v691 = vrot.slane %v672, %v690
    %v692 = vadd.f32 %v652, %v691
    %v693 = vadd.f32 %v655, %v691
    %vm694 = vcmp.ge.f32.partialorder %v692, 0.0
    %vm695 = vcmp.ge.f32.partialorder %v693, 0.0
    %v696 = vmul.f32 %v692, 0.2
    %v697 = vmul.f32 %v693, 0.2
    %v698 = vsel %vm694, %v692, %v696
    %v699 = vsel %vm695, %v693, %v697
    %v700 = vsel %vm51, %v698, -1e+30
    %v701 = vsel %vm52, %v699, -1e+30
    %v702 = vsel %vm53, %v700, -inf
    %703 = vmax.xlane.f32.xlu0 %v702
    %v704 = vpop.xlane.xlu0 %703
    %v705 = vsel %vm53, %v701, -inf
    %706 = vmax.xlane.f32.xlu0 %v705
    %v707 = vpop.xlane.xlu0 %706
    %v708 = vsub.f32 %v700, %v704
    %v709 = vsub.f32 %v701, %v707
    %v710 = vmul.f32 %v708, 1.442695
    %v711 = vpow.pop %v710
    %v712 = vmul.f32 %v709, 1.442695
    %v713 = vpow.pop %v712
    %v714 = vsel %vm53, %v711, 0.0
    %715 = vadd.xlane.f32.xlu0 %v714
    %v716 = vpop.xlane.xlu0 %715
    %v717 = vsel %vm53, %v713, 0.0
    %718 = vadd.xlane.f32.xlu0 %v717
    %v719 = vpop.xlane.xlu0 %718
    %v720 = vrcp.pop %v716
    %v721 = vrcp.pop %v719
    %v722 = vmul.f32 %v711, %v720
    %v723 = vmul.f32 %v713, %v721
    %v725 = vsel %vm53, %v722, 0
    %v728 = vsel %vm53, %v723, 0
    %730 = vmatprep.subr.mxu0 0.0
    %731 = vmatpush1.msra.mxu0 %v620
    %732 = vmatprep.subr.mxu0 0.0
    %733 = vmatpush1.msra.mxu0 %v625
    %734 = vmatprep.subr.mxu0 0.0
    %735 = vmatpush1.msra.mxu0 0.0
    %736 = vmatprep.subr.mxu0 0.0
    %737 = vmatpush1.msra.mxu0 0.0
    %738 = vmatprep.subr.mxu0 0.0
    %739 = vmatpush1.msra.mxu0 0.0
    %740 = vmatprep.subr.mxu0 0.0
    %741 = vmatpush1.msra.mxu0 0.0
    %742 = vmatprep.subr.mxu0 0.0
    %743 = vmatpush1.msra.mxu0 0.0
    %744 = vmatprep.subr.mxu0 0.0
    %745 = vmatpush1.msra.mxu0 0.0
    %746 = vmatprep.subr.mxu0 0.0
    %747 = vmatpush1.msra.mxu0 0.0
    %748 = vmatprep.subr.mxu0 0.0
    %749 = vmatpush1.msra.mxu0 0.0
    %750 = vmatprep.subr.mxu0 0.0
    %751 = vmatpush1.msra.mxu0 0.0
    %752 = vmatprep.subr.mxu0 0.0
    %753 = vmatpush1.msra.mxu0 0.0
    %754 = vmatprep.subr.mxu0 0.0
    %755 = vmatpush1.msra.mxu0 0.0
    %756 = vmatprep.subr.mxu0 0.0
    %757 = vmatpush1.msra.mxu0 0.0
    %758 = vmatprep.subr.mxu0 0.0
    %759 = vmatpush1.msra.mxu0 0.0
    %760 = vmatprep.subr.mxu0 0.0
    %761 = vmatpush1.msra.mxu0 0.0
    %762 = vmatprep.subr.mxu0 0.0
    %763 = vmatpush1.msra.mxu0 0.0
    %764 = vmatprep.subr.mxu0 0.0
    %765 = vmatpush1.msra.mxu0 0.0
    %766 = vmatprep.subr.mxu0 0.0
    %767 = vmatpush1.msra.mxu0 0.0
    %768 = vmatprep.subr.mxu0 0.0
    %769 = vmatpush1.msra.mxu0 0.0
    %770 = vmatprep.subr.mxu0 0.0
    %771 = vmatpush1.msra.mxu0 0.0
    %772 = vmatprep.subr.mxu0 0.0
    %773 = vmatpush1.msra.mxu0 0.0
    %774 = vmatprep.subr.mxu0 0.0
    %775 = vmatpush1.msra.mxu0 0.0
    %776 = vmatprep.subr.mxu0 0.0
    %777 = vmatpush1.msra.mxu0 0.0
    %778 = vmatprep.subr.mxu0 0.0
    %779 = vmatpush1.msra.mxu0 0.0
    %780 = vmatprep.subr.mxu0 0.0
    %781 = vmatpush1.msra.mxu0 0.0
    %782 = vmatprep.subr.mxu0 0.0
    %783 = vmatpush1.msra.mxu0 0.0
    %784 = vmatprep.subr.mxu0 0.0
    %785 = vmatpush1.msra.mxu0 0.0
    %786 = vmatprep.subr.mxu0 0.0
    %787 = vmatpush1.msra.mxu0 0.0
    %788 = vmatprep.subr.mxu0 0.0
    %789 = vmatpush1.msra.mxu0 0.0
    %790 = vmatprep.subr.mxu0 0.0
    %791 = vmatpush1.msra.mxu0 0.0
    %792 = vmatprep.subr.mxu0 0.0
    %793 = vmatpush1.msra.mxu0 0.0
    %794 = vmatprep.mubr.f32.mxu0 0.0
    %795 = vmatmul.mubr.f32.gmra.mrb[0].mxu0 %v725
    %v796 = vpop.f32.mrb[0].mxu0
    %v797 = vadd.f32 0.0, %v796
    %v798 = vpop.f32.mrb[0].mxu0
    %799 = vmatprep.mubr.f32.mxu0 0.0
    %800 = vmatmul.mubr.f32.gmra.mrb[0].mxu0 %v728
    %v801 = vpop.f32.mrb[0].mxu0
    %v802 = vadd.f32 0.0, %v801
    %v803 = vpop.f32.mrb[0].mxu0
    %804 = vdwg.mxu0
    %v805 = vsel %vm523, %v797, 0.0
    %v806 = vsel %vm524, %v802, 0.0
    %v808 = vlaneseq
    %v809 = vshrl.u32 %v808, 7
    %v810 = vsub.s32 0, %v809
    %v811 = vrot.slane %v545, %v810
    %v813 = vadd.f32 %v805, %v811
    %v814 = vadd.f32 %v806, %v811
    %vm815 = vcmp.ne.f32.partialorder %v813, %v813
    %vm816 = vcmp.ne.f32.partialorder %v814, %v814
    %v817 = vsel %vm815, -100.0, %v813
    %v818 = vsel %vm816, -100.0, %v814
    %v820 = vlaneseq
    %v821 = vshrl.u32 %v820, 7
    %v822 = vsub.s32 0, %v821
    %v823 = vrot.slane %v42, %v822
    %v826 = vsel %vm156, %v817, 0
    %v829 = vsel %vm156, %v818, 0
    %831 = vmatprep.subr.mxu0 0.0
    %832 = vmatpush1.msra.mxu0 %v43
    %833 = vmatprep.subr.mxu0 0.0
    %834 = vmatpush1.msra.mxu0 %v44
    %835 = vmatprep.subr.mxu0 0.0
    %836 = vmatpush1.msra.mxu0 %v45
    %837 = vmatprep.subr.mxu0 0.0
    %838 = vmatpush1.msra.mxu0 %v46
    %839 = vmatprep.subr.mxu0 0.0
    %840 = vmatpush1.msra.mxu0 0.0
    %841 = vmatprep.subr.mxu0 0.0
    %842 = vmatpush1.msra.mxu0 0.0
    %843 = vmatprep.subr.mxu0 0.0
    %844 = vmatpush1.msra.mxu0 0.0
    %845 = vmatprep.subr.mxu0 0.0
    %846 = vmatpush1.msra.mxu0 0.0
    %847 = vmatprep.subr.mxu0 0.0
    %848 = vmatpush1.msra.mxu0 0.0
    %849 = vmatprep.subr.mxu0 0.0
    %850 = vmatpush1.msra.mxu0 0.0
    %851 = vmatprep.subr.mxu0 0.0
    %852 = vmatpush1.msra.mxu0 0.0
    %853 = vmatprep.subr.mxu0 0.0
    %854 = vmatpush1.msra.mxu0 0.0
    %855 = vmatprep.subr.mxu0 0.0
    %856 = vmatpush1.msra.mxu0 0.0
    %857 = vmatprep.subr.mxu0 0.0
    %858 = vmatpush1.msra.mxu0 0.0
    %859 = vmatprep.subr.mxu0 0.0
    %860 = vmatpush1.msra.mxu0 0.0
    %861 = vmatprep.subr.mxu0 0.0
    %862 = vmatpush1.msra.mxu0 0.0
    %863 = vmatprep.subr.mxu0 0.0
    %864 = vmatpush1.msra.mxu0 0.0
    %865 = vmatprep.subr.mxu0 0.0
    %866 = vmatpush1.msra.mxu0 0.0
    %867 = vmatprep.subr.mxu0 0.0
    %868 = vmatpush1.msra.mxu0 0.0
    %869 = vmatprep.subr.mxu0 0.0
    %870 = vmatpush1.msra.mxu0 0.0
    %871 = vmatprep.subr.mxu0 0.0
    %872 = vmatpush1.msra.mxu0 0.0
    %873 = vmatprep.subr.mxu0 0.0
    %874 = vmatpush1.msra.mxu0 0.0
    %875 = vmatprep.subr.mxu0 0.0
    %876 = vmatpush1.msra.mxu0 0.0
    %877 = vmatprep.subr.mxu0 0.0
    %878 = vmatpush1.msra.mxu0 0.0
    %879 = vmatprep.subr.mxu0 0.0
    %880 = vmatpush1.msra.mxu0 0.0
    %881 = vmatprep.subr.mxu0 0.0
    %882 = vmatpush1.msra.mxu0 0.0
    %883 = vmatprep.subr.mxu0 0.0
    %884 = vmatpush1.msra.mxu0 0.0
    %885 = vmatprep.subr.mxu0 0.0
    %886 = vmatpush1.msra.mxu0 0.0
    %887 = vmatprep.subr.mxu0 0.0
    %888 = vmatpush1.msra.mxu0 0.0
    %889 = vmatprep.subr.mxu0 0.0
    %890 = vmatpush1.msra.mxu0 0.0
    %891 = vmatprep.subr.mxu0 0.0
    %892 = vmatpush1.msra.mxu0 0.0
    %893 = vmatprep.subr.mxu0 0.0
    %894 = vmatpush1.msra.mxu0 0.0
    %895 = vmatprep.mubr.f32.mxu0 0.0
    %896 = vmatmul.mubr.f32.gmra.mrb[0].mxu0 %v826
    %v897 = vpop.f32.mrb[0].mxu0
    %v898 = vadd.f32 %v823, %v897
    %v899 = vpop.f32.mrb[0].mxu0
    %900 = vmatprep.mubr.f32.mxu0 0.0
    %901 = vmatmul.mubr.f32.gmra.mrb[0].mxu0 %v829
    %v902 = vpop.f32.mrb[0].mxu0
    %v903 = vadd.f32 %v823, %v902
    %v904 = vpop.f32.mrb[0].mxu0
    %905 = vdwg.mxu0
    %906 = vst.msk [vmem:[#allocation2] sm:$0xff] %vm156, %v898
    %907 = vst.msk [vmem:[#allocation2 + $0x8] sm:$0xff] %vm156, %v903
    // Predicated region
    $region50: #{tpu_custom_call.1} parent=1 // pred_check
      _
    $region51: #{tpu_custom_call.1} parent=1 // pred_check_branch
      %909 = sbr.rel (0) target = $region53
    $region52: #{tpu_custom_call.1} parent=1 // pred_region
      %s911 = ssub.s32 256, 256
      %912 = vsyncadd [#allocation3], %s911
      %s913 = sshll.u32 [#allocation2], 4
      %s914 = int_to_ptr.vmem [resolvable:$true] %s913
      %919 = dma.vmem_to_hbm [thread:$0]  %s914, 256, %s12, [#allocation3], 128, 128, 8
    $region53: #{tpu_custom_call.1} parent=1 // pred_fallthru
      _
    // Predicated region
    $region54: #{tpu_custom_call.1} parent=1 // pred_check
      _
    $region55: #{tpu_custom_call.1} parent=1 // pred_check_branch
      %921 = sbr.rel (0) target = $region57
    $region56: #{tpu_custom_call.1} parent=1 // pred_region
      %922 = dma.done [#allocation3], 256
    $region57: #{tpu_custom_call.1} parent=1 // pred_fallthru
      _
    %923 = vsyncpa [#allocation3], 1

</llo_original>
